<compile_context>
chip_gen: v5e
topology: v5e:2x2
jax: 0.10.0
libtpu: 0.0.40
codegen_flags: <defaults>
</compile_context>

<pallas_src>
import jax
import jax.numpy as jnp
from jax import lax
from jax.experimental import pallas as pl
from jax.experimental.pallas import tpu as pltpu


# ----------------------------------------------------------------------------
# Kernels
# ----------------------------------------------------------------------------

def se_fused_kernel(ws_ref, bs_ref, w1_ref, b1_ref, w2_ref, b2_ref, x_ref, o_ref):
    """Single-pass SE for one (n, d-tile) block holding the full spatial extent.

    out = max(xc, sigmoid(ws.x + bs) * x)
    xc  = sigmoid(w2 . relu(w1 . mean_S(x) + b1) + b2)   (broadcast over S)
    """
    x = x_ref[...]                                                   # (C, TD, S)
    # --- spatial-attention gate (convs1 + sigmoid): VPU weighted channel reduce ---
    gate = jax.nn.sigmoid(jnp.sum(x * ws_ref[...], axis=0) + bs_ref[0, 0])   # (TD, S)
    xs = x * gate[None, :, :]                                        # (C, TD, S)
    # --- channel-excitation gate: global HW mean -> C -> C/2 -> C MLP -> sigmoid ---
    pooled = jnp.mean(x, axis=-1, keepdims=True)                     # (C, TD, 1)
    h = jnp.maximum(
        jnp.sum(w1_ref[...] * pooled[:, None, :, :], axis=0) + b1_ref[...], 0.0)   # (Ch, TD, 1)
    xc = jax.nn.sigmoid(
        jnp.sum(w2_ref[...] * h[:, None, :, :], axis=0) + b2_ref[...])             # (C, TD, 1)
    # xc broadcasts over the spatial (lane) axis.
    o_ref[...] = jnp.maximum(xc, xs)


def se_spatial_kernel(ws_ref, bs_ref, x_ref, xc_ref, o_ref):
    """Fallback streaming kernel (xc precomputed): out = max(xc, sigmoid(ws.x+bs)*x)."""
    x = x_ref[...]                                                   # (C, TD, TS)
    gate = jax.nn.sigmoid(jnp.sum(x * ws_ref[...], axis=0) + bs_ref[0, 0])   # (TD, TS)
    xs = x * gate[None, :, :]                                        # (C, TD, TS)
    o_ref[...] = jnp.maximum(xc_ref[...], xs)                        # xc: (C, TD, 1)


# ----------------------------------------------------------------------------
# Tiling helpers
# ----------------------------------------------------------------------------

def _divisor_tile(dim, align, cap):
    """Largest multiple of `align` that divides `dim` and is <= cap, else full dim."""
    if dim <= cap:
        return dim
    t = (max(cap, align) // align) * align
    while t >= align:
        if dim % t == 0:
            return t
        t -= align
    return dim  # no aligned divisor: full extent is always legal


# ----------------------------------------------------------------------------
# Forward wrapper
# ----------------------------------------------------------------------------

def se_forward(x, params, *,
               spatial_tile_cap=4096,
               target_tile_bytes=2 * 1024 * 1024,
               fused_block_bytes_cap=6 * 1024 * 1024,
               allow_fuse=True):
    """x: (N, C, D, H, W) float32 (PyTorch NCDHW). Returns same shape/layout."""
    ws, bs, w1, b1, w2, b2 = params
    N, C, D, H, W = x.shape
    Ch = w1.shape[1]
    S = H * W
    itemsize = x.dtype.itemsize

    xr = x.reshape(N, C, D, S)        # free reshape; stays NCDHW-native
    ws3 = ws.reshape(C, 1, 1)

    # --- preferred: fused single-pass kernel (one HBM read + one write of x) ---
    td_f_cap = max(1, target_tile_bytes // max(1, C * S * itemsize))
    td_f = _divisor_tile(D, 8, td_f_cap)
    fused_fits = C * td_f * S * itemsize <= fused_block_bytes_cap
    if allow_fuse and fused_fits:
        out = pl.pallas_call(
            se_fused_kernel,
            out_shape=jax.ShapeDtypeStruct((N, C, D, S), x.dtype),
            grid_spec=pltpu.PrefetchScalarGridSpec(
                num_scalar_prefetch=0,
                grid=(N, D // td_f),
                in_specs=[
                    # convs1 weight / MLP weights: tiny constant blocks, VMEM-resident.
                    pl.BlockSpec((C, 1, 1), lambda n, d: (0, 0, 0)),
                    # convs1 bias: scalar in SMEM.
                    pl.BlockSpec(memory_space=pltpu.MemorySpace.SMEM),
                    pl.BlockSpec((C, Ch, 1, 1), lambda n, d: (0, 0, 0, 0)),
                    pl.BlockSpec((Ch, 1, 1), lambda n, d: (0, 0, 0)),
                    pl.BlockSpec((Ch, C, 1, 1), lambda n, d: (0, 0, 0, 0)),
                    pl.BlockSpec((C, 1, 1), lambda n, d: (0, 0, 0)),
                    # x: channels whole, depth on sublanes, full spatial on lanes.
                    pl.BlockSpec((None, C, td_f, S), lambda n, d: (n, 0, d, 0)),
                ],
                out_specs=pl.BlockSpec((None, C, td_f, S), lambda n, d: (n, 0, d, 0)),
            ),
            compiler_params=pltpu.CompilerParams(
                dimension_semantics=("parallel", "parallel"),
                vmem_limit_bytes=32 * 1024 * 1024,
            ),
        )(ws3, bs,
          w1.reshape(C, Ch, 1, 1), b1.reshape(Ch, 1, 1),
          w2.reshape(Ch, C, 1, 1), b2.reshape(C, 1, 1),
          xr)
        return out.reshape(N, C, D, H, W)

    # --- fallback: tiny excitation branch in XLA, streaming kernel tiles D and S ---
    hp = lax.Precision.HIGHEST
    pooled = jnp.mean(xr, axis=-1)                                             # (N, C, D)
    h = jnp.maximum(jnp.einsum("ncd,ck->ndk", pooled, w1, precision=hp) + b1[0], 0.0)
    xc_ndc = jax.nn.sigmoid(jnp.einsum("ndk,kc->ndc", h, w2, precision=hp) + b2[0])
    xc = jnp.transpose(xc_ndc, (0, 2, 1))[:, :, :, None]                       # (N, C, D, 1)

    ts = _divisor_tile(S, 128, spatial_tile_cap)                               # lane axis
    max_td = max(1, target_tile_bytes // (C * ts * itemsize))
    td = _divisor_tile(D, 8, max_td)                                           # sublane axis
    grid = (N, D // td, S // ts)

    out = pl.pallas_call(
        se_spatial_kernel,
        out_shape=jax.ShapeDtypeStruct((N, C, D, S), x.dtype),
        grid_spec=pltpu.PrefetchScalarGridSpec(
            num_scalar_prefetch=0,
            grid=grid,
            in_specs=[
                pl.BlockSpec((C, 1, 1), lambda n, d, s: (0, 0, 0)),
                pl.BlockSpec(memory_space=pltpu.MemorySpace.SMEM),
                pl.BlockSpec((None, C, td, ts), lambda n, d, s: (n, 0, d, s)),
                pl.BlockSpec((None, C, td, 1), lambda n, d, s: (n, 0, d, 0)),
            ],
            out_specs=pl.BlockSpec((None, C, td, ts), lambda n, d, s: (n, 0, d, s)),
        ),
        compiler_params=pltpu.CompilerParams(
            dimension_semantics=("parallel", "parallel", "parallel"),
            vmem_limit_bytes=32 * 1024 * 1024,
        ),
    )(ws3, bs, xr, xc)
    return out.reshape(N, C, D, H, W)


# ----------------------------------------------------------------------------
# Pure-JAX reference + params
# ----------------------------------------------------------------------------

def se_reference(x, params):
    """Pure-JAX reference matching the PyTorch forward."""
    ws, bs, w1, b1, w2, b2 = params
    hp = lax.Precision.HIGHEST
    xt = jnp.transpose(x, (0, 2, 3, 4, 1))                                     # (N, D, H, W, C)
    xs = jax.nn.sigmoid(jnp.einsum("ndhwc,co->ndhwo", xt, ws, precision=hp) + bs[0]) * xt
    pooled = jnp.mean(xt, axis=(2, 3), keepdims=True)                          # (N, D, 1, 1, C)
    h = jnp.maximum(jnp.einsum("ndhwc,ck->ndhwk", pooled, w1, precision=hp) + b1[0], 0.0)
    xc = jax.nn.sigmoid(jnp.einsum("ndhwk,kc->ndhwc", h, w2, precision=hp) + b2[0])
    out = jnp.maximum(xc, xs)
    return jnp.transpose(out, (0, 4, 1, 2, 3))


def init_params(key, in_channel):
    """Deterministic synthetic parameters (1x1x1 conv weights flattened to matmuls)."""
    C, Ch = in_channel, in_channel // 2
    k = jax.random.split(key, 6)
    ws = jax.random.normal(k[0], (C, 1), jnp.float32) * 0.5    # convs1: C -> 1
    bs = jax.random.normal(k[1], (1, 1), jnp.float32) * 0.1
    w1 = jax.random.normal(k[2], (C, Ch), jnp.float32) * 0.5   # conv1: C -> C/2
    b1 = jax.random.normal(k[3], (1, Ch), jnp.float32) * 0.1
    w2 = jax.random.normal(k[4], (Ch, C), jnp.float32) * 0.5   # conv2: C/2 -> C
    b2 = jax.random.normal(k[5], (1, C), jnp.float32) * 0.1
    return ws, bs, w1, b1, w2, b2


if __name__ == "__main__":
    key = jax.random.PRNGKey(0)
    kx1, kx2, kp = jax.random.split(key, 3)

    N, C, D, H, W = 2, 4, 4, 8, 8
    x1 = jax.random.normal(kx1, (N, C, D, H, W), jnp.float32)
    params = init_params(kp, C)

    # Test 1: fused single-pass path, full-extent (D, S) blocks, grid (N, 1).
    out1 = jax.block_until_ready(se_forward(x1, params))
    ref1 = jax.block_until_ready(se_reference(x1, params))
    assert out1.shape == (N, C, D, H, W)
    assert jnp.allclose(out1, ref1, atol=1e-5, rtol=1e-5), "test1 mismatch vs reference"

    # Test 2: fused path with tiled depth (td=8 < D), grid (2, 2).
    N2, C2, D2, H2, W2 = 2, 4, 16, 16, 16
    x2 = jax.random.normal(kx2, (N2, C2, D2, H2, W2), jnp.float32)
    ref2 = jax.block_until_ready(se_reference(x2, params))
    out2 = jax.block_until_ready(se_forward(x2, params, target_tile_bytes=8192))
    assert out2.shape == (N2, C2, D2, H2, W2)
    assert jnp.allclose(out2, ref2, atol=1e-5, rtol=1e-5), "test2 mismatch vs reference"

    # Test 3: two-pass fallback (S tiled at 128, depth tiled at 8), grid (2, 2, 2).
    out3 = jax.block_until_ready(
        se_forward(x2, params, allow_fuse=False,
                   spatial_tile_cap=128, target_tile_bytes=4096))
    assert jnp.allclose(out3, ref2, atol=1e-5, rtol=1e-5), "test3 mismatch vs reference"

    print("KERNEL_OK")
</pallas_src>

<mosaic_0001>
module attributes {stable_mosaic.version = 11 : i64} {
  func.func @se_fused_kernel(%arg0: i32, %arg1: i32, %arg2: memref<4x1x1xf32, #tpu.memory_space<vmem>>, %arg3: memref<1x1xf32, #tpu.memory_space<smem>>, %arg4: memref<4x2x1x1xf32, #tpu.memory_space<vmem>>, %arg5: memref<2x1x1xf32, #tpu.memory_space<vmem>>, %arg6: memref<2x4x1x1xf32, #tpu.memory_space<vmem>>, %arg7: memref<4x1x1xf32, #tpu.memory_space<vmem>>, %arg8: memref<1x4x4x64xf32, #tpu.memory_space<vmem>>, %arg9: memref<1x4x4x64xf32, #tpu.memory_space<vmem>>) attributes {dimension_semantics = [#tpu.dimension_semantics<parallel>, #tpu.dimension_semantics<parallel>], iteration_bounds = array<i64: 2, 1>, scalar_prefetch = 0 : i64, scratch_operands = 0 : i64, tpu.core_type = #tpu.core_type<tc>, window_params = [{pipeline_mode = #tpu.pipeline_mode<synchronous>, transform_indices = @transform_0, window_bounds = array<i64: 4, 1, 1>}, {transform_indices = @transform_1, window_bounds = array<i64: 1, 1>}, {pipeline_mode = #tpu.pipeline_mode<synchronous>, transform_indices = @transform_2, window_bounds = array<i64: 4, 2, 1, 1>}, {pipeline_mode = #tpu.pipeline_mode<synchronous>, transform_indices = @transform_3, window_bounds = array<i64: 2, 1, 1>}, {pipeline_mode = #tpu.pipeline_mode<synchronous>, transform_indices = @transform_4, window_bounds = array<i64: 2, 4, 1, 1>}, {pipeline_mode = #tpu.pipeline_mode<synchronous>, transform_indices = @transform_5, window_bounds = array<i64: 4, 1, 1>}, {transform_indices = @transform_6, window_bounds = array<i64: 1, 4, 4, 64>}, {transform_indices = @transform_7, window_bounds = array<i64: 1, 4, 4, 64>}]} {
    %c0 = arith.constant 0 : index
    %c0_0 = arith.constant 0 : index
    %c0_1 = arith.constant 0 : index
    %c0_2 = arith.constant 0 : index
    %0 = vector.load %arg8[%c0, %c0_0, %c0_1, %c0_2] : memref<1x4x4x64xf32, #tpu.memory_space<vmem>>, vector<1x4x4x64xf32>
    %1 = vector.shape_cast %0 : vector<1x4x4x64xf32> to vector<4x4x64xf32>
    %c0_3 = arith.constant 0 : index
    %c0_4 = arith.constant 0 : index
    %c0_5 = arith.constant 0 : index
    %2 = vector.load %arg2[%c0_3, %c0_4, %c0_5] : memref<4x1x1xf32, #tpu.memory_space<vmem>>, vector<4x1x1xf32>
    %3 = vector.broadcast %2 : vector<4x1x1xf32> to vector<4x4x64xf32>
    %4 = arith.mulf %1, %3 : vector<4x4x64xf32>
    %cst = arith.constant dense<0.000000e+00> : vector<4x64xf32>
    %5 = vector.multi_reduction <add>, %4, %cst [0] : vector<4x4x64xf32> to vector<4x64xf32>
    %c0_6 = arith.constant 0 : index
    %c0_7 = arith.constant 0 : index
    %6 = memref.load %arg3[%c0_6, %c0_7] : memref<1x1xf32, #tpu.memory_space<smem>>
    %7 = vector.broadcast %6 : f32 to vector<4x64xf32>
    %8 = arith.addf %5, %7 : vector<4x64xf32>
    %9 = arith.negf %8 : vector<4x64xf32>
    %10 = math.exp %9 : vector<4x64xf32>
    %cst_8 = arith.constant 1.000000e+00 : f32
    %11 = vector.broadcast %cst_8 : f32 to vector<4x64xf32>
    %12 = arith.addf %11, %10 : vector<4x64xf32>
    %13 = arith.divf %11, %12 : vector<4x64xf32>
    %14 = vector.shape_cast %13 : vector<4x64xf32> to vector<1x4x64xf32>
    %15 = vector.broadcast %14 : vector<1x4x64xf32> to vector<4x4x64xf32>
    %16 = arith.mulf %1, %15 : vector<4x4x64xf32>
    %cst_9 = arith.constant dense<0.000000e+00> : vector<4x4xf32>
    %17 = vector.multi_reduction <add>, %1, %cst_9 [2] : vector<4x4x64xf32> to vector<4x4xf32>
    %18 = vector.shape_cast %17 : vector<4x4xf32> to vector<4x4x1xf32>
    %cst_10 = arith.constant 6.400000e+01 : f32
    %19 = vector.broadcast %cst_10 : f32 to vector<4x4x1xf32>
    %20 = arith.divf %18, %19 : vector<4x4x1xf32>
    %c0_11 = arith.constant 0 : index
    %c0_12 = arith.constant 0 : index
    %c0_13 = arith.constant 0 : index
    %c0_14 = arith.constant 0 : index
    %21 = vector.load %arg4[%c0_11, %c0_12, %c0_13, %c0_14] : memref<4x2x1x1xf32, #tpu.memory_space<vmem>>, vector<4x2x1x1xf32>
    %22 = vector.shape_cast %20 : vector<4x4x1xf32> to vector<4x1x4x1xf32>
    %23 = vector.broadcast %21 : vector<4x2x1x1xf32> to vector<4x2x4x1xf32>
    %24 = vector.broadcast %22 : vector<4x1x4x1xf32> to vector<4x2x4x1xf32>
    %25 = arith.mulf %23, %24 : vector<4x2x4x1xf32>
    %cst_15 = arith.constant dense<0.000000e+00> : vector<2x4x1xf32>
    %26 = vector.multi_reduction <add>, %25, %cst_15 [0] : vector<4x2x4x1xf32> to vector<2x4x1xf32>
    %c0_16 = arith.constant 0 : index
    %c0_17 = arith.constant 0 : index
    %c0_18 = arith.constant 0 : index
    %27 = vector.load %arg5[%c0_16, %c0_17, %c0_18] : memref<2x1x1xf32, #tpu.memory_space<vmem>>, vector<2x1x1xf32>
    %28 = vector.broadcast %27 : vector<2x1x1xf32> to vector<2x4x1xf32>
    %29 = arith.addf %26, %28 : vector<2x4x1xf32>
    %cst_19 = arith.constant 0.000000e+00 : f32
    %30 = vector.broadcast %cst_19 : f32 to vector<2x4x1xf32>
    %31 = arith.maximumf %29, %30 : vector<2x4x1xf32>
    %c0_20 = arith.constant 0 : index
    %c0_21 = arith.constant 0 : index
    %c0_22 = arith.constant 0 : index
    %c0_23 = arith.constant 0 : index
    %32 = vector.load %arg6[%c0_20, %c0_21, %c0_22, %c0_23] : memref<2x4x1x1xf32, #tpu.memory_space<vmem>>, vector<2x4x1x1xf32>
    %33 = vector.shape_cast %31 : vector<2x4x1xf32> to vector<2x1x4x1xf32>
    %34 = vector.broadcast %32 : vector<2x4x1x1xf32> to vector<2x4x4x1xf32>
    %35 = vector.broadcast %33 : vector<2x1x4x1xf32> to vector<2x4x4x1xf32>
    %36 = arith.mulf %34, %35 : vector<2x4x4x1xf32>
    %cst_24 = arith.constant dense<0.000000e+00> : vector<4x4x1xf32>
    %37 = vector.multi_reduction <add>, %36, %cst_24 [0] : vector<2x4x4x1xf32> to vector<4x4x1xf32>
    %c0_25 = arith.constant 0 : index
    %c0_26 = arith.constant 0 : index
    %c0_27 = arith.constant 0 : index
    %38 = vector.load %arg7[%c0_25, %c0_26, %c0_27] : memref<4x1x1xf32, #tpu.memory_space<vmem>>, vector<4x1x1xf32>
    %39 = vector.broadcast %38 : vector<4x1x1xf32> to vector<4x4x1xf32>
    %40 = arith.addf %37, %39 : vector<4x4x1xf32>
    %41 = arith.negf %40 : vector<4x4x1xf32>
    %42 = math.exp %41 : vector<4x4x1xf32>
    %cst_28 = arith.constant 1.000000e+00 : f32
    %43 = vector.broadcast %cst_28 : f32 to vector<4x4x1xf32>
    %44 = arith.addf %43, %42 : vector<4x4x1xf32>
    %45 = arith.divf %43, %44 : vector<4x4x1xf32>
    %46 = vector.broadcast %45 : vector<4x4x1xf32> to vector<4x4x64xf32>
    %47 = arith.maximumf %46, %16 : vector<4x4x64xf32>
    %c0_29 = arith.constant 0 : index
    %c0_30 = arith.constant 0 : index
    %c0_31 = arith.constant 0 : index
    %c0_32 = arith.constant 0 : index
    %48 = vector.load %arg9[%c0_29, %c0_30, %c0_31, %c0_32] : memref<1x4x4x64xf32, #tpu.memory_space<vmem>>, vector<1x4x4x64xf32>
    %49 = vector.shape_cast %48 : vector<1x4x4x64xf32> to vector<4x4x64xf32>
    %50 = vector.shape_cast %47 : vector<4x4x64xf32> to vector<1x4x4x64xf32>
    tpu.vector_store %arg9[%c0_29, %c0_30, %c0_31, %c0_32], %50 {strides = array<i32>} : memref<1x4x4x64xf32, #tpu.memory_space<vmem>>, vector<1x4x4x64xf32>,
    return
  }
  func.func @transform_0(%arg0: i32, %arg1: i32) -> (i32, i32, i32) {
    %c0_i32 = arith.constant 0 : i32
    %c0_i32_0 = arith.constant 0 : i32
    %c0_i32_1 = arith.constant 0 : i32
    %c0_i32_2 = arith.constant 0 : i32
    return %c0_i32, %c0_i32_0, %c0_i32_1 : i32, i32, i32
  }
  func.func @transform_1(%arg0: i32, %arg1: i32) -> (i32, i32) {
    %c0_i32 = arith.constant 0 : i32
    %c0_i32_0 = arith.constant 0 : i32
    %c0_i32_1 = arith.constant 0 : i32
    return %c0_i32, %c0_i32_0 : i32, i32
  }
  func.func @transform_2(%arg0: i32, %arg1: i32) -> (i32, i32, i32, i32) {
    %c0_i32 = arith.constant 0 : i32
    %c0_i32_0 = arith.constant 0 : i32
    %c0_i32_1 = arith.constant 0 : i32
    %c0_i32_2 = arith.constant 0 : i32
    %c0_i32_3 = arith.constant 0 : i32
    return %c0_i32, %c0_i32_0, %c0_i32_1, %c0_i32_2 : i32, i32, i32, i32
  }
  func.func @transform_3(%arg0: i32, %arg1: i32) -> (i32, i32, i32) {
    %c0_i32 = arith.constant 0 : i32
    %c0_i32_0 = arith.constant 0 : i32
    %c0_i32_1 = arith.constant 0 : i32
    %c0_i32_2 = arith.constant 0 : i32
    return %c0_i32, %c0_i32_0, %c0_i32_1 : i32, i32, i32
  }
  func.func @transform_4(%arg0: i32, %arg1: i32) -> (i32, i32, i32, i32) {
    %c0_i32 = arith.constant 0 : i32
    %c0_i32_0 = arith.constant 0 : i32
    %c0_i32_1 = arith.constant 0 : i32
    %c0_i32_2 = arith.constant 0 : i32
    %c0_i32_3 = arith.constant 0 : i32
    return %c0_i32, %c0_i32_0, %c0_i32_1, %c0_i32_2 : i32, i32, i32, i32
  }
  func.func @transform_5(%arg0: i32, %arg1: i32) -> (i32, i32, i32) {
    %c0_i32 = arith.constant 0 : i32
    %c0_i32_0 = arith.constant 0 : i32
    %c0_i32_1 = arith.constant 0 : i32
    %c0_i32_2 = arith.constant 0 : i32
    return %c0_i32, %c0_i32_0, %c0_i32_1 : i32, i32, i32
  }
  func.func @transform_6(%arg0: i32, %arg1: i32) -> (i32, i32, i32, i32) {
    %c0_i32 = arith.constant 0 : i32
    %c0_i32_0 = arith.constant 0 : i32
    %c0_i32_1 = arith.constant 0 : i32
    return %arg0, %c0_i32, %arg1, %c0_i32_0 : i32, i32, i32, i32
  }
  func.func @transform_7(%arg0: i32, %arg1: i32) -> (i32, i32, i32, i32) {
    %c0_i32 = arith.constant 0 : i32
    %c0_i32_0 = arith.constant 0 : i32
    %c0_i32_1 = arith.constant 0 : i32
    return %arg0, %c0_i32, %arg1, %c0_i32_0 : i32, i32, i32, i32
  }
}

</mosaic_0001>

<llo_original>
// kernel: tpu_custom_call.1
$region0: #{tpu_custom_call.1}
  #allocation0 [shape = 'u32[]', space=smem, size = 0x4, offset = 0x4, fixed_abs, tag = 'smem constant byte address 0x4 - core index']
  #allocation1 [shape = 'u32[72,128]{1,0:T(1,128)}', space=vmem, size = 0x9000, scoped, tag = 'internal scratch']
  #allocation2 [shape = 'f32[1,1]{1,0:T(1,128)S(6)}', space=smem, size = 0x200, scoped, tag = 'scoped memory for tpu_custom_call.1']
  %s0 = inlined_call_operand.vmem [shape: f32[4,1,1], index: 0, kind: input, shape index: {}]
  %s1 = inlined_call_operand.<no memory space> [shape: f32[1,1], index: 1, kind: input, shape index: {}]
  %s2 = inlined_call_operand.vmem [shape: f32[4,2,1,1], index: 2, kind: input, shape index: {}]
  %s3 = inlined_call_operand.vmem [shape: f32[2,1,1], index: 3, kind: input, shape index: {}]
  %s4 = inlined_call_operand.vmem [shape: f32[2,4,1,1], index: 4, kind: input, shape index: {}]
  %s5 = inlined_call_operand.vmem [shape: f32[4,1,1], index: 5, kind: input, shape index: {}]
  %s6 = inlined_call_operand.hbm [shape: f32[2,4,4,64], index: 6, kind: input, shape index: {}]
  %s7 = inlined_call_operand.hbm [shape: f32[2,4,4,64], index: 7, kind: output, shape index: {}]
  %s8 = sld [smem:[#allocation0]]
  $region65: #{tpu_custom_call.1} parent=0
    _
  %s10 = ssub.s32 1, %s8
  %s11 = scalar_select 0, %s10, %s8
  %12 = sst [smem:[#allocation2]] %s1
  $region1: #{tpu_custom_call.1} parent=0
    #allocation3 [shape = 'u8[16384]{0}', space=vmem, size = 0x4000, scoped, tag = 'input window, operand 6']
    #allocation4 [shape = 's32[2]{0}', space=sflag, size = 0x8, scoped, tag = 'scoped memory for tpu_custom_call.1']
    #allocation5 [shape = 's32[2]{0}', space=sflag, size = 0x8, scoped, tag = 'scoped memory for tpu_custom_call.1']
    #allocation6 [shape = 'u8[16384]{0}', space=vmem, size = 0x4000, scoped, tag = 'output window, operand 0']
    %13 = vsyncpa [#allocation4], 0
    %s14 = scalar_lea.sflag [#allocation4], 1
    %15 = vsyncpa %s14, 0
    %16 = vsyncpa [#allocation5], 0
    %s17 = scalar_lea.sflag [#allocation5], 1
    %18 = vsyncpa %s17, 0
    loop: start=0, step=1, limit=4
    $region2: #{tpu_custom_call.1} parent=1 // loop_pre_header
      _
    $region3: #{tpu_custom_call.1} parent=1 // loop_header
      %s20 = sphi 0, %s24
      %p21 = scmp.ge.s32.totalorder %s20, 4
      %s27 = sphi 0, %s39
      %s28 = sphi 0, %s35
      %s29 = sphi 0, %s27
      %s30 = sphi 0, %s28
      %s31 = sphi 0, %s29
      %s32 = sphi 0, %s30
      %s40 = sphi 0, %s40
      %s42 = sphi 0, %s40
      %s43 = sphi 0, %s42
      %s57 = sphi 0, %s43
      %s61 = sphi 0, %s61
      %s63 = sphi 0, %s61
      %s64 = sphi 0, %s63
      %s78 = sphi 0, %s64
      %s82 = sphi 0, %s82
      %s84 = sphi 0, %s82
      %s85 = sphi 0, %s84
      %s99 = sphi 0, %s85
      %s103 = sphi 0, %s103
      %s105 = sphi 0, %s103
      %s106 = sphi 0, %s105
      %s120 = sphi 0, %s106
      %s124 = sphi 0, %s124
      %s126 = sphi 0, %s124
      %s127 = sphi 0, %s126
      %s141 = sphi 0, %s127
      %s145 = sphi 0, %s145
      %s147 = sphi 0, %s145
      %s148 = sphi 0, %s147
      %s162 = sphi 0, %s148
      %s170 = sphi 0, %s172
      %s173 = sphi 0, %s170
      %s174 = sphi 0, %s173
      %s190 = sphi 0, %s174
      %s198 = sphi 0, %s200
      %s201 = sphi 0, %s198
      %s202 = sphi 0, %s201
      %s218 = sphi 0, %s202
    $region4: #{tpu_custom_call.1} parent=1 // loop_header_branch
      %23 = sbr.rel (%p21) target = $region8
    $region5: #{tpu_custom_call.1} parent=1 // loop_body
      %s25 = ssub.s32 %s20, 1
      %s26 = ssub.s32 %s20, 2
      %s33 = sadd.s32 1, %s28
      %p34 = scmp.ge.s32.totalorder %s33, 1
      %s35 = scalar_select %p34, 0, %s33
      %s36 = sadd.s32 1, %s27
      %s37 = scalar_select %p34, %s36, %s27
      %p38 = scmp.ge.s32.totalorder %s37, 2
      %s39 = scalar_select %p38, 0, %s37
      %s41 = sadd.s32 %s40, 1
      %p44 = scmp.eq.s32.totalorder %s20, 1
      %p45 = scmp.ne.s32.totalorder %s40, %s42
      %p46 = scmp.eq.s32.totalorder %s20, 0
      %p47 = por %p45, %p46
      %p48 = scmp.ne.s32.totalorder %s40, %s42
      %p49 = scmp.eq.s32.totalorder %s25, 1
      %p50 = por %p48, %p49
      %p51 = scmp.ne.s32.totalorder %s42, %s43
      %p52 = scmp.eq.s32.totalorder %s25, 0
      %p53 = por %p51, %p52
      %p54 = scmp.ne.s32.totalorder %s42, %s43
      %p55 = scmp.eq.s32.totalorder %s26, 1
      %p56 = por %p54, %p55
      %p58 = scmp.ne.s32.totalorder %s43, %s57
      %p59 = scmp.eq.s32.totalorder %s26, 0
      %p60 = por %p58, %p59
      %s62 = sadd.s32 %s61, 1
      %p65 = scmp.eq.s32.totalorder %s20, 1
      %p66 = scmp.ne.s32.totalorder %s61, %s63
      %p67 = scmp.eq.s32.totalorder %s20, 0
      %p68 = por %p66, %p67
      %p69 = scmp.ne.s32.totalorder %s61, %s63
      %p70 = scmp.eq.s32.totalorder %s25, 1
      %p71 = por %p69, %p70
      %p72 = scmp.ne.s32.totalorder %s63, %s64
      %p73 = scmp.eq.s32.totalorder %s25, 0
      %p74 = por %p72, %p73
      %p75 = scmp.ne.s32.totalorder %s63, %s64
      %p76 = scmp.eq.s32.totalorder %s26, 1
      %p77 = por %p75, %p76
      %p79 = scmp.ne.s32.totalorder %s64, %s78
      %p80 = scmp.eq.s32.totalorder %s26, 0
      %p81 = por %p79, %p80
      %s83 = sadd.s32 %s82, 1
      %p86 = scmp.eq.s32.totalorder %s20, 1
      %p87 = scmp.ne.s32.totalorder %s82, %s84
      %p88 = scmp.eq.s32.totalorder %s20, 0
      %p89 = por %p87, %p88
      %p90 = scmp.ne.s32.totalorder %s82, %s84
      %p91 = scmp.eq.s32.totalorder %s25, 1
      %p92 = por %p90, %p91
      %p93 = scmp.ne.s32.totalorder %s84, %s85
      %p94 = scmp.eq.s32.totalorder %s25, 0
      %p95 = por %p93, %p94
      %p96 = scmp.ne.s32.totalorder %s84, %s85
      %p97 = scmp.eq.s32.totalorder %s26, 1
      %p98 = por %p96, %p97
      %p100 = scmp.ne.s32.totalorder %s85, %s99
      %p101 = scmp.eq.s32.totalorder %s26, 0
      %p102 = por %p100, %p101
      %s104 = sadd.s32 %s103, 1
      %p107 = scmp.eq.s32.totalorder %s20, 1
      %p108 = scmp.ne.s32.totalorder %s103, %s105
      %p109 = scmp.eq.s32.totalorder %s20, 0
      %p110 = por %p108, %p109
      %p111 = scmp.ne.s32.totalorder %s103, %s105
      %p112 = scmp.eq.s32.totalorder %s25, 1
      %p113 = por %p111, %p112
      %p114 = scmp.ne.s32.totalorder %s105, %s106
      %p115 = scmp.eq.s32.totalorder %s25, 0
      %p116 = por %p114, %p115
      %p117 = scmp.ne.s32.totalorder %s105, %s106
      %p118 = scmp.eq.s32.totalorder %s26, 1
      %p119 = por %p117, %p118
      %p121 = scmp.ne.s32.totalorder %s106, %s120
      %p122 = scmp.eq.s32.totalorder %s26, 0
      %p123 = por %p121, %p122
      %s125 = sadd.s32 %s124, 1
      %p128 = scmp.eq.s32.totalorder %s20, 1
      %p129 = scmp.ne.s32.totalorder %s124, %s126
      %p130 = scmp.eq.s32.totalorder %s20, 0
      %p131 = por %p129, %p130
      %p132 = scmp.ne.s32.totalorder %s124, %s126
      %p133 = scmp.eq.s32.totalorder %s25, 1
      %p134 = por %p132, %p133
      %p135 = scmp.ne.s32.totalorder %s126, %s127
      %p136 = scmp.eq.s32.totalorder %s25, 0
      %p137 = por %p135, %p136
      %p138 = scmp.ne.s32.totalorder %s126, %s127
      %p139 = scmp.eq.s32.totalorder %s26, 1
      %p140 = por %p138, %p139
      %p142 = scmp.ne.s32.totalorder %s127, %s141
      %p143 = scmp.eq.s32.totalorder %s26, 0
      %p144 = por %p142, %p143
      %s146 = sadd.s32 %s145, 1
      %p149 = scmp.eq.s32.totalorder %s20, 1
      %p150 = scmp.ne.s32.totalorder %s145, %s147
      %p151 = scmp.eq.s32.totalorder %s20, 0
      %p152 = por %p150, %p151
      %p153 = scmp.ne.s32.totalorder %s145, %s147
      %p154 = scmp.eq.s32.totalorder %s25, 1
      %p155 = por %p153, %p154
      %p156 = scmp.ne.s32.totalorder %s147, %s148
      %p157 = scmp.eq.s32.totalorder %s25, 0
      %p158 = por %p156, %p157
      %p159 = scmp.ne.s32.totalorder %s147, %s148
      %p160 = scmp.eq.s32.totalorder %s26, 1
      %p161 = por %p159, %p160
      %p163 = scmp.ne.s32.totalorder %s148, %s162
      %p164 = scmp.eq.s32.totalorder %s26, 0
      %p165 = por %p163, %p164
      %s166 = ssub.s32 %s27, %s39
      %s167 = ssub.s32 %s28, %s35
      %s168 = sor.u32 %s166, %s167
      %p169 = scmp.eq.s32.totalorder %s168, 0
      %s171 = sadd.s32 %s170, 1
      %s172 = scalar_select %p169, %s170, %s171
      %p175 = pneg %p169
      %p176 = scmp.eq.s32.totalorder %s20, 1
      %p177 = por %p175, %p176
      %p178 = scmp.ne.s32.totalorder %s170, %s173
      %p179 = scmp.eq.s32.totalorder %s20, 0
      %p180 = por %p178, %p179
      %p181 = scmp.ne.s32.totalorder %s170, %s173
      %p182 = scmp.eq.s32.totalorder %s25, 1
      %p183 = por %p181, %p182
      %p184 = scmp.ne.s32.totalorder %s173, %s174
      %p185 = scmp.eq.s32.totalorder %s25, 0
      %p186 = por %p184, %p185
      %p187 = scmp.ne.s32.totalorder %s173, %s174
      %p188 = scmp.eq.s32.totalorder %s26, 1
      %p189 = por %p187, %p188
      %p191 = scmp.ne.s32.totalorder %s174, %s190
      %p192 = scmp.eq.s32.totalorder %s26, 0
      %p193 = por %p191, %p192
      %s194 = ssub.s32 %s27, %s39
      %s195 = ssub.s32 %s28, %s35
      %s196 = sor.u32 %s194, %s195
      %p197 = scmp.eq.s32.totalorder %s196, 0
      %s199 = sadd.s32 %s198, 1
      %s200 = scalar_select %p197, %s198, %s199
      %p203 = pneg %p197
      %p204 = scmp.eq.s32.totalorder %s20, 1
      %p205 = por %p203, %p204
      %p206 = scmp.ne.s32.totalorder %s198, %s201
      %p207 = scmp.eq.s32.totalorder %s20, 0
      %p208 = por %p206, %p207
      %p209 = scmp.ne.s32.totalorder %s198, %s201
      %p210 = scmp.eq.s32.totalorder %s25, 1
      %p211 = por %p209, %p210
      %p212 = scmp.ne.s32.totalorder %s201, %s202
      %p213 = scmp.eq.s32.totalorder %s25, 0
      %p214 = por %p212, %p213
      %p215 = scmp.ne.s32.totalorder %s201, %s202
      %p216 = scmp.eq.s32.totalorder %s26, 1
      %p217 = por %p215, %p216
      %p219 = scmp.ne.s32.totalorder %s202, %s218
      %p220 = scmp.eq.s32.totalorder %s26, 0
      %p221 = por %p219, %p220
      %p222 = scmp.le.s32.totalorder 1, %s20
      %p223 = scmp.lt.s32.totalorder %s20, 3
      %p224 = pnand %p222, %p223
      %p225 = pneg %p224
      // Predicated region
      $region9: #{tpu_custom_call.1} parent=5 // pred_check
        _
      $region10: #{tpu_custom_call.1} parent=5 // pred_check_branch
        %227 = sbr.rel (%p224) target = $region12
      $region11: #{tpu_custom_call.1} parent=5 // pred_region
        %s228 = ssub.s32 %s20, 1
        // Predicated region
        $region13: #{tpu_custom_call.1} parent=11 // pred_check
          %p229 = pneg %p53
        $region14: #{tpu_custom_call.1} parent=11 // pred_check_branch
          %231 = sbr.rel (%p229) target = $region16
        $region15: #{tpu_custom_call.1} parent=11 // pred_region
          _
        $region16: #{tpu_custom_call.1} parent=11 // pred_fallthru
          _
        // Predicated region
        $region17: #{tpu_custom_call.1} parent=11 // pred_check
          %p232 = pneg %p74
        $region18: #{tpu_custom_call.1} parent=11 // pred_check_branch
          %234 = sbr.rel (%p232) target = $region20
        $region19: #{tpu_custom_call.1} parent=11 // pred_region
          _
        $region20: #{tpu_custom_call.1} parent=11 // pred_fallthru
          _
        // Predicated region
        $region21: #{tpu_custom_call.1} parent=11 // pred_check
          %p235 = pneg %p95
        $region22: #{tpu_custom_call.1} parent=11 // pred_check_branch
          %237 = sbr.rel (%p235) target = $region24
        $region23: #{tpu_custom_call.1} parent=11 // pred_region
          _
        $region24: #{tpu_custom_call.1} parent=11 // pred_fallthru
          _
        // Predicated region
        $region25: #{tpu_custom_call.1} parent=11 // pred_check
          %p238 = pneg %p116
        $region26: #{tpu_custom_call.1} parent=11 // pred_check_branch
          %240 = sbr.rel (%p238) target = $region28
        $region27: #{tpu_custom_call.1} parent=11 // pred_region
          _
        $region28: #{tpu_custom_call.1} parent=11 // pred_fallthru
          _
        // Predicated region
        $region29: #{tpu_custom_call.1} parent=11 // pred_check
          %p241 = pneg %p137
        $region30: #{tpu_custom_call.1} parent=11 // pred_check_branch
          %243 = sbr.rel (%p241) target = $region32
        $region31: #{tpu_custom_call.1} parent=11 // pred_region
          _
        $region32: #{tpu_custom_call.1} parent=11 // pred_fallthru
          _
        // Predicated region
        $region33: #{tpu_custom_call.1} parent=11 // pred_check
          %p244 = pneg %p158
        $region34: #{tpu_custom_call.1} parent=11 // pred_check_branch
          %246 = sbr.rel (%p244) target = $region36
        $region35: #{tpu_custom_call.1} parent=11 // pred_region
          _
        $region36: #{tpu_custom_call.1} parent=11 // pred_fallthru
          _
      $region12: #{tpu_custom_call.1} parent=5 // pred_fallthru
        _
      %p247 = scmp.lt.s32.totalorder %s20, 2
      // Predicated region
      $region37: #{tpu_custom_call.1} parent=5 // pred_check
        %p248 = pneg %p247
      $region38: #{tpu_custom_call.1} parent=5 // pred_check_branch
        %250 = sbr.rel (%p248) target = $region40
      $region39: #{tpu_custom_call.1} parent=5 // pred_region
        // Predicated region
        $region41: #{tpu_custom_call.1} parent=39 // pred_check
          %p251 = pneg %p180
        $region42: #{tpu_custom_call.1} parent=39 // pred_check_branch
          %253 = sbr.rel (%p251) target = $region44
        $region43: #{tpu_custom_call.1} parent=39 // pred_region
          %s254 = sand.u32 %s170, 1
          %s255 = scalar_lea.sflag [#allocation4], %s254
          %s256 = sand.u32 %s170, 1
          %s257 = smul.addr %s256, 16
          %s258 = scalar_lea.vmem [#allocation3], %s257
          %260 = vsyncadd %s255, 0
          %s261 = smul.addr %s27, 4
          %s262 = sadd.s32 %s28, %s261
          %s263 = smul.addr %s262, 4
          %s264 = scalar_lea.hbm %s6, %s263
          %s265 = sshll.u32 %s264, 4
          %s266 = int_to_ptr.hbm [resolvable:$true] %s265
          %s267 = sshll.u32 %s258, 4
          %s268 = int_to_ptr.vmem [resolvable:$true] %s267
          %273 = dma.hbm_to_vmem [thread:$0]  %s266, 256, %s268, %s255, 64, 64, 4
        $region44: #{tpu_custom_call.1} parent=39 // pred_fallthru
          _
      $region40: #{tpu_custom_call.1} parent=5 // pred_fallthru
        _
      %p274 = scmp.le.s32.totalorder 1, %s20
      %p275 = scmp.lt.s32.totalorder %s20, 3
      %p276 = pnand %p274, %p275
      %p277 = pneg %p276
      // Predicated region
      $region45: #{tpu_custom_call.1} parent=5 // pred_check
        _
      $region46: #{tpu_custom_call.1} parent=5 // pred_check_branch
        %279 = sbr.rel (%p276) target = $region48
      $region47: #{tpu_custom_call.1} parent=5 // pred_region
        %s280 = ssub.s32 %s20, 1
        %s281 = sand.u32 %s173, 1
        %s282 = scalar_lea.sflag [#allocation4], %s281
        %s283 = sand.u32 %s173, 1
        %s284 = smul.addr %s283, 16
        %s285 = scalar_lea.vmem [#allocation3], %s284
        // Predicated region
        $region49: #{tpu_custom_call.1} parent=47 // pred_check
          %p286 = pneg %p186
        $region50: #{tpu_custom_call.1} parent=47 // pred_check_branch
          %288 = sbr.rel (%p286) target = $region52
        $region51: #{tpu_custom_call.1} parent=47 // pred_region
          %290 = dma.done %s282, 256
        $region52: #{tpu_custom_call.1} parent=47 // pred_fallthru
          _
        %p291 = pneg %p53
        %p292 = pneg %p50
        %p293 = pneg %p74
        %p294 = pneg %p71
        %p295 = pneg %p95
        %p296 = pneg %p92
        %p297 = pneg %p116
        %p298 = pneg %p113
        %p299 = pneg %p137
        %p300 = pneg %p134
        %p301 = pneg %p158
        %p302 = pneg %p155
        %s303 = sand.u32 %s173, 1
        %s304 = scalar_lea.sflag [#allocation4], %s303
        %s305 = sand.u32 %s173, 1
        %s306 = smul.addr %s305, 16
        %s307 = scalar_lea.vmem [#allocation3], %s306
        %p308 = pneg %p186
        %p309 = pneg %p183
        %p310 = pneg %p214
        %p311 = pneg %p211
        %s312 = sand.u32 %s201, 1
        %s313 = scalar_lea.sflag [#allocation5], %s312
        %s314 = sand.u32 %s201, 1
        %s315 = smul.addr %s314, 16
        %s316 = scalar_lea.vmem [#allocation6], %s315
        %v317 = vld [vmem:[%s285] sm:$0xf]
        %v318 = vld [vmem:[%s285 + $0x4] sm:$0xf]
        %v319 = vld [vmem:[%s285 + $0x8] sm:$0xf]
        %v320 = vld [vmem:[%s285 + $0xc] sm:$0xf]
        %v321 = vld [vmem:[%s0] sm:$0x1]
        %v322 = vld [vmem:[%s0 + $0x1] sm:$0x1]
        %v323 = vld [vmem:[%s0 + $0x2] sm:$0x1]
        %v324 = vld [vmem:[%s0 + $0x3] sm:$0x1]
        %v329 = vperm.slane %v321, 0
        %v330 = vperm.slane %v322, 0
        %v331 = vperm.slane %v323, 0
        %v332 = vperm.slane %v324, 0
        %333 = vset.pattern.permute.xlu0 0
        %334 = vperm.xlu0 %333, %v329
        %v335 = vpop.permute.xlu0 %334
        %337 = vset.pattern.permute.xlu0 0
        %338 = vperm.xlu0 %337, %v330
        %v339 = vpop.permute.xlu0 %338
        %341 = vset.pattern.permute.xlu0 0
        %342 = vperm.xlu0 %341, %v331
        %v343 = vpop.permute.xlu0 %342
        %345 = vset.pattern.permute.xlu0 0
        %346 = vperm.xlu0 %345, %v332
        %v347 = vpop.permute.xlu0 %346
        %v349 = vmul.f32 %v317, %v335
        %v350 = vmul.f32 %v318, %v339
        %v351 = vmul.f32 %v319, %v343
        %v352 = vmul.f32 %v320, %v347
        %vm353 = vcmask 519168
        %v354 = vsel %vm353, %v349, 0.0
        %v355 = vsel %vm353, %v350, 0.0
        %v356 = vadd.f32 %v354, %v355
        %v357 = vsel %vm353, %v351, 0.0
        %v358 = vadd.f32 %v356, %v357
        %v359 = vsel %vm353, %v352, 0.0
        %v360 = vadd.f32 %v358, %v359
        %s361 = sld [smem:[#allocation2]]
        %v362 = vstv %s361
        %v363 = vadd.f32 %v360, %v362
        %v364 = vxor.u32 %v363, 2147483648
        %v365 = vmul.f32 %v364, 1.442695
        %v366 = vpow.pop %v365
        %v367 = vadd.f32 %v366, 1.0
        %v368 = vrcp.pop %v367
        %v369 = vmul.f32 %v367, %v368
        %v370 = vsub.f32 1.0, %v369
        %v371 = vmul.f32 %v368, %v370
        %v372 = vadd.f32 %v368, %v371
        %vm373 = vweird.f32 %v367
        %vm374 = vweird.f32 %v368
        %vm375 = vmor %vm373, %vm374
        %v376 = vsel %vm375, %v368, %v372
        %v377 = vand.u32 2147483647, %v367
        %vm378 = vcmp.eq.f32.partialorder %v377, 8.507059e+37
        %v379 = vand.u32 %v367, 2147483648
        %v380 = vor.u32 1.1754944e-38, %v379
        %v381 = vsel %vm378, %v380, %v376
        %v382 = vmul.f32 1.0, %v381
        %v383 = vmul.f32 %v317, %v382
        %v384 = vmul.f32 %v318, %v382
        %v385 = vmul.f32 %v319, %v382
        %v386 = vmul.f32 %v320, %v382
        %v387 = vsel %vm353, %v317, 0.0
        %388 = vadd.xlane.f32.xlu0 %v387
        %v389 = vpop.xlane.xlu0 %388
        %v390 = vsel %vm353, %v318, 0.0
        %391 = vadd.xlane.f32.xlu0 %v390
        %v392 = vpop.xlane.xlu0 %391
        %v393 = vsel %vm353, %v319, 0.0
        %394 = vadd.xlane.f32.xlu0 %v393
        %v395 = vpop.xlane.xlu0 %394
        %v396 = vsel %vm353, %v320, 0.0
        %397 = vadd.xlane.f32.xlu0 %v396
        %v398 = vpop.xlane.xlu0 %397
        %v399 = vrcp.pop 64.0
        %v400 = vmul.f32 64.0, %v399
        %v401 = vsub.f32 1.0, %v400
        %v402 = vmul.f32 %v399, %v401
        %v403 = vadd.f32 %v399, %v402
        %vm404 = vweird.f32 %v399
        %v405 = vsel %vm404, %v399, %v403
        %v406 = vmul.f32 %v389, %v405
        %v407 = vmul.f32 %v392, %v405
        %v408 = vmul.f32 %v395, %v405
        %v409 = vmul.f32 %v398, %v405
        %v410 = vld [vmem:[%s2] sm:$0x1]
        %v411 = vld [vmem:[%s2 + $0x1] sm:$0x1]
        %v412 = vld [vmem:[%s2 + $0x2] sm:$0x1]
        %v413 = vld [vmem:[%s2 + $0x3] sm:$0x1]
        %v414 = vld [vmem:[%s2 + $0x4] sm:$0x1]
        %v415 = vld [vmem:[%s2 + $0x5] sm:$0x1]
        %v416 = vld [vmem:[%s2 + $0x6] sm:$0x1]
        %v417 = vld [vmem:[%s2 + $0x7] sm:$0x1]
        %v426 = vperm.slane %v410, 0
        %v427 = vperm.slane %v411, 0
        %v428 = vperm.slane %v412, 0
        %v429 = vperm.slane %v413, 0
        %v430 = vperm.slane %v414, 0
        %v431 = vperm.slane %v415, 0
        %v432 = vperm.slane %v416, 0
        %v433 = vperm.slane %v417, 0
        %v442 = vmul.f32 %v426, %v406
        %v443 = vmul.f32 %v427, %v406
        %v444 = vmul.f32 %v428, %v407
        %v445 = vmul.f32 %v429, %v407
        %v446 = vmul.f32 %v430, %v408
        %v447 = vmul.f32 %v431, %v408
        %v448 = vmul.f32 %v432, %v409
        %v449 = vmul.f32 %v433, %v409
        %vm450 = vcmask 3072
        %v451 = vsel %vm450, %v442, 0.0
        %v452 = vsel %vm450, %v444, 0.0
        %v453 = vadd.f32 %v451, %v452
        %v454 = vsel %vm450, %v446, 0.0
        %v455 = vadd.f32 %v453, %v454
        %v456 = vsel %vm450, %v448, 0.0
        %v457 = vadd.f32 %v455, %v456
        %v458 = vsel %vm450, %v443, 0.0
        %v459 = vsel %vm450, %v445, 0.0
        %v460 = vadd.f32 %v458, %v459
        %v461 = vsel %vm450, %v447, 0.0
        %v462 = vadd.f32 %v460, %v461
        %v463 = vsel %vm450, %v449, 0.0
        %v464 = vadd.f32 %v462, %v463
        %v465 = vld [vmem:[%s3] sm:$0x1]
        %v466 = vld [vmem:[%s3 + $0x1] sm:$0x1]
        %v469 = vperm.slane %v465, 0
        %v470 = vperm.slane %v466, 0
        %v473 = vadd.f32 %v457, %v469
        %v474 = vadd.f32 %v464, %v470
        %v475 = vmax.f32 %v473, 0.0
        %v476 = vmax.f32 %v474, 0.0
        %v477 = vld [vmem:[%s4] sm:$0x1]
        %v478 = vld [vmem:[%s4 + $0x1] sm:$0x1]
        %v479 = vld [vmem:[%s4 + $0x2] sm:$0x1]
        %v480 = vld [vmem:[%s4 + $0x3] sm:$0x1]
        %v481 = vld [vmem:[%s4 + $0x4] sm:$0x1]
        %v482 = vld [vmem:[%s4 + $0x5] sm:$0x1]
        %v483 = vld [vmem:[%s4 + $0x6] sm:$0x1]
        %v484 = vld [vmem:[%s4 + $0x7] sm:$0x1]
        %v493 = vperm.slane %v477, 0
        %v494 = vperm.slane %v478, 0
        %v495 = vperm.slane %v479, 0
        %v496 = vperm.slane %v480, 0
        %v497 = vperm.slane %v481, 0
        %v498 = vperm.slane %v482, 0
        %v499 = vperm.slane %v483, 0
        %v500 = vperm.slane %v484, 0
        %v509 = vmul.f32 %v493, %v475
        %v510 = vmul.f32 %v494, %v475
        %v511 = vmul.f32 %v495, %v475
        %v512 = vmul.f32 %v496, %v475
        %v513 = vmul.f32 %v497, %v476
        %v514 = vmul.f32 %v498, %v476
        %v515 = vmul.f32 %v499, %v476
        %v516 = vmul.f32 %v500, %v476
        %v517 = vsel %vm450, %v509, 0.0
        %v518 = vsel %vm450, %v513, 0.0
        %v519 = vadd.f32 %v517, %v518
        %v520 = vsel %vm450, %v510, 0.0
        %v521 = vsel %vm450, %v514, 0.0
        %v522 = vadd.f32 %v520, %v521
        %v523 = vsel %vm450, %v511, 0.0
        %v524 = vsel %vm450, %v515, 0.0
        %v525 = vadd.f32 %v523, %v524
        %v526 = vsel %vm450, %v512, 0.0
        %v527 = vsel %vm450, %v516, 0.0
        %v528 = vadd.f32 %v526, %v527
        %v529 = vld [vmem:[%s5] sm:$0x1]
        %v530 = vld [vmem:[%s5 + $0x1] sm:$0x1]
        %v531 = vld [vmem:[%s5 + $0x2] sm:$0x1]
        %v532 = vld [vmem:[%s5 + $0x3] sm:$0x1]
        %v537 = vperm.slane %v529, 0
        %v538 = vperm.slane %v530, 0
        %v539 = vperm.slane %v531, 0
        %v540 = vperm.slane %v532, 0
        %v545 = vadd.f32 %v519, %v537
        %v546 = vadd.f32 %v522, %v538
        %v547 = vadd.f32 %v525, %v539
        %v548 = vadd.f32 %v528, %v540
        %v549 = vxor.u32 %v545, 2147483648
        %v550 = vxor.u32 %v546, 2147483648
        %v551 = vxor.u32 %v547, 2147483648
        %v552 = vxor.u32 %v548, 2147483648
        %v553 = vmul.f32 %v549, 1.442695
        %v554 = vpow.pop %v553
        %v555 = vmul.f32 %v550, 1.442695
        %v556 = vpow.pop %v555
        %v557 = vmul.f32 %v551, 1.442695
        %v558 = vpow.pop %v557
        %v559 = vmul.f32 %v552, 1.442695
        %v560 = vpow.pop %v559
        %v561 = vadd.f32 %v554, 1.0
        %v562 = vadd.f32 %v556, 1.0
        %v563 = vadd.f32 %v558, 1.0
        %v564 = vadd.f32 %v560, 1.0
        %v565 = vrcp.pop %v561
        %v566 = vmul.f32 %v561, %v565
        %v567 = vsub.f32 1.0, %v566
        %v568 = vmul.f32 %v565, %v567
        %v569 = vadd.f32 %v565, %v568
        %vm570 = vweird.f32 %v561
        %vm571 = vweird.f32 %v565
        %vm572 = vmor %vm570, %vm571
        %v573 = vsel %vm572, %v565, %v569
        %v574 = vand.u32 2147483647, %v561
        %vm575 = vcmp.eq.f32.partialorder %v574, 8.507059e+37
        %v576 = vand.u32 %v561, 2147483648
        %v577 = vor.u32 1.1754944e-38, %v576
        %v578 = vsel %vm575, %v577, %v573
        %v579 = vmul.f32 1.0, %v578
        %v580 = vrcp.pop %v562
        %v581 = vmul.f32 %v562, %v580
        %v582 = vsub.f32 1.0, %v581
        %v583 = vmul.f32 %v580, %v582
        %v584 = vadd.f32 %v580, %v583
        %vm585 = vweird.f32 %v562
        %vm586 = vweird.f32 %v580
        %vm587 = vmor %vm585, %vm586
        %v588 = vsel %vm587, %v580, %v584
        %v589 = vand.u32 2147483647, %v562
        %vm590 = vcmp.eq.f32.partialorder %v589, 8.507059e+37
        %v591 = vand.u32 %v562, 2147483648
        %v592 = vor.u32 1.1754944e-38, %v591
        %v593 = vsel %vm590, %v592, %v588
        %v594 = vmul.f32 1.0, %v593
        %v595 = vrcp.pop %v563
        %v596 = vmul.f32 %v563, %v595
        %v597 = vsub.f32 1.0, %v596
        %v598 = vmul.f32 %v595, %v597
        %v599 = vadd.f32 %v595, %v598
        %vm600 = vweird.f32 %v563
        %vm601 = vweird.f32 %v595
        %vm602 = vmor %vm600, %vm601
        %v603 = vsel %vm602, %v595, %v599
        %v604 = vand.u32 2147483647, %v563
        %vm605 = vcmp.eq.f32.partialorder %v604, 8.507059e+37
        %v606 = vand.u32 %v563, 2147483648
        %v607 = vor.u32 1.1754944e-38, %v606
        %v608 = vsel %vm605, %v607, %v603
        %v609 = vmul.f32 1.0, %v608
        %v610 = vrcp.pop %v564
        %v611 = vmul.f32 %v564, %v610
        %v612 = vsub.f32 1.0, %v611
        %v613 = vmul.f32 %v610, %v612
        %v614 = vadd.f32 %v610, %v613
        %vm615 = vweird.f32 %v564
        %vm616 = vweird.f32 %v610
        %vm617 = vmor %vm615, %vm616
        %v618 = vsel %vm617, %v610, %v614
        %v619 = vand.u32 2147483647, %v564
        %vm620 = vcmp.eq.f32.partialorder %v619, 8.507059e+37
        %v621 = vand.u32 %v564, 2147483648
        %v622 = vor.u32 1.1754944e-38, %v621
        %v623 = vsel %vm620, %v622, %v618
        %v624 = vmul.f32 1.0, %v623
        %626 = vset.pattern.permute.xlu0 0
        %627 = vperm.xlu0 %626, %v579
        %v628 = vpop.permute.xlu0 %627
        %631 = vset.pattern.permute.xlu0 0
        %632 = vperm.xlu0 %631, %v594
        %v633 = vpop.permute.xlu0 %632
        %636 = vset.pattern.permute.xlu0 0
        %637 = vperm.xlu0 %636, %v609
        %v638 = vpop.permute.xlu0 %637
        %641 = vset.pattern.permute.xlu0 0
        %642 = vperm.xlu0 %641, %v624
        %v643 = vpop.permute.xlu0 %642
        %v645 = vmax.f32 %v628, %v383
        %v646 = vmax.f32 %v633, %v384
        %v647 = vmax.f32 %v638, %v385
        %v648 = vmax.f32 %v643, %v386
        %649 = vst.msk [vmem:[%s316] sm:$0xf] %vm353, %v645
        %650 = vst.msk [vmem:[%s316 + $0x4] sm:$0xf] %vm353, %v646
        %651 = vst.msk [vmem:[%s316 + $0x8] sm:$0xf] %vm353, %v647
        %652 = vst.msk [vmem:[%s316 + $0xc] sm:$0xf] %vm353, %v648
        %s653 = sand.u32 %s201, 1
        %s654 = scalar_lea.sflag [#allocation5], %s653
        %s655 = sand.u32 %s201, 1
        %s656 = smul.addr %s655, 16
        %s657 = scalar_lea.vmem [#allocation6], %s656
        // Predicated region
        $region53: #{tpu_custom_call.1} parent=47 // pred_check
          %p658 = pneg %p211
        $region54: #{tpu_custom_call.1} parent=47 // pred_check_branch
          %660 = sbr.rel (%p658) target = $region56
        $region55: #{tpu_custom_call.1} parent=47 // pred_region
          %662 = vsyncadd %s654, 0
          %s663 = smul.addr %s29, 4
          %s664 = sadd.s32 %s30, %s663
          %s665 = smul.addr %s664, 4
          %s666 = scalar_lea.hbm %s7, %s665
          %s667 = sshll.u32 %s657, 4
          %s668 = int_to_ptr.vmem [resolvable:$true] %s667
          %s669 = sshll.u32 %s666, 4
          %s670 = int_to_ptr.hbm [resolvable:$true] %s669
          %675 = dma.vmem_to_hbm [thread:$0]  %s668, 256, %s670, %s654, 64, 64, 4
        $region56: #{tpu_custom_call.1} parent=47 // pred_fallthru
          _
      $region48: #{tpu_custom_call.1} parent=5 // pred_fallthru
        _
      %p676 = scmp.le.s32.totalorder 2, %s20
      // Predicated region
      $region57: #{tpu_custom_call.1} parent=5 // pred_check
        %p677 = pneg %p676
      $region58: #{tpu_custom_call.1} parent=5 // pred_check_branch
        %679 = sbr.rel (%p677) target = $region60
      $region59: #{tpu_custom_call.1} parent=5 // pred_region
        %s680 = ssub.s32 %s20, 2
        // Predicated region
        $region61: #{tpu_custom_call.1} parent=59 // pred_check
          %p681 = pneg %p217
        $region62: #{tpu_custom_call.1} parent=59 // pred_check_branch
          %683 = sbr.rel (%p681) target = $region64
        $region63: #{tpu_custom_call.1} parent=59 // pred_region
          %s684 = sand.u32 %s202, 1
          %s685 = scalar_lea.sflag [#allocation5], %s684
          %s686 = sand.u32 %s202, 1
          %s687 = smul.addr %s686, 16
          %s688 = scalar_lea.vmem [#allocation6], %s687
          %690 = dma.done %s685, 256
        $region64: #{tpu_custom_call.1} parent=59 // pred_fallthru
          _
      $region60: #{tpu_custom_call.1} parent=5 // pred_fallthru
        _
    $region6: #{tpu_custom_call.1} parent=1 // loop_footer
      %s24 = sadd.s32 1, %s20
    $region7: #{tpu_custom_call.1} parent=1 // loop_footer_branch
      %19 = sbr.rel target = $region3
    $region8: #{tpu_custom_call.1} parent=1 // loop_exit
      _
    %691 = vsyncpa [#allocation4], 1
    %s692 = scalar_lea.sflag [#allocation4], 1
    %693 = vsyncpa %s692, 1
    %694 = vsyncpa [#allocation5], 1
    %s695 = scalar_lea.sflag [#allocation5], 1
    %696 = vsyncpa %s695, 1

</llo_original>
